<compile_context>
chip_gen: v7x
topology: tpu7x:2x2x1
jax: 0.10.0
libtpu: 0.0.40
codegen_flags: <defaults>
</compile_context>

<pallas_src>
import functools

import jax
import jax.numpy as jnp
from jax.experimental import pallas as pl
from jax.experimental.pallas import tpu as pltpu


def _round_up(a, m):
    return (a + m - 1) // m * m


def _choose_tm(n, tm_max):
    """Row-tile size: big (multiple of 256) to amortize per-step overhead,
    sized from the grid to minimize padded work, >=2 steps for dual-TC v7x."""
    if n <= 256:
        return _round_up(n, 8)
    steps = max(2, pl.cdiv(n, tm_max))
    return min(_round_up(pl.cdiv(n, steps), 256), _round_up(tm_max, 256))


def _view_disc_kernel(x_ref, w1_ref, b1_ref, w2_ref, b2_ref, o_ref):
    # x_ref:  (TM, H_IN)    f32  -> cast to bf16 in-kernel (VPU) for the MXU
    # w1_ref: (H_IN, H_HID) bf16    b1_ref: (1, H_HID) f32
    # w2_ref: (H_HID, V)    bf16    b2_ref: (1, V)     f32
    # o_ref:  (TM, V)       f32  softmax probabilities (only real columns)
    x = x_ref[...].astype(jnp.bfloat16)

    # Linear 1 + bias + ReLU (bf16 MXU matmul, f32 accumulate / epilogue).
    h = jnp.dot(x, w1_ref[...], preferred_element_type=jnp.float32)
    h = jnp.maximum(h + b1_ref[...], 0.0)

    # Linear 2 -> logits (bf16 MXU matmul, f32 accumulate + f32 bias).
    logits = jnp.dot(h.astype(jnp.bfloat16), w2_ref[...],
                     preferred_element_type=jnp.float32) + b2_ref[...]

    # Numerically stable softmax over the V real columns; exact divide so the
    # rows sum to 1 to f32 precision.
    m = jnp.max(logits, axis=-1, keepdims=True)
    e = jnp.exp(logits - m)
    denom = jnp.sum(e, axis=-1, keepdims=True)
    o_ref[...] = (e / denom).astype(o_ref.dtype)


@functools.partial(jax.jit, static_argnames=("tm_max",))
def view_discriminator(tx, w1, b1, w2, b2, *, tm_max=2048):
    """Fused (Linear -> ReLU -> Linear -> softmax) forward pass.

    tx: (B, S, H_IN) float32.  Returns (B, S, N_VIEWS) float32.
    Weights stored (in, out): w1 (H_IN, H_HID), w2 (H_HID, N_VIEWS).
    """
    B, S, H_IN = tx.shape
    H_HID = w1.shape[1]
    V = w2.shape[1]
    N = B * S

    TM = _choose_tm(N, tm_max)
    grid = (pl.cdiv(N, TM),)

    # Wrapper-side work is metadata only: reshape (free), tiny weight casts.
    x2d = tx.reshape(N, H_IN)                       # stays f32, no pad/cast pass
    w1_b = w1.astype(jnp.bfloat16)
    w2_b = w2.astype(jnp.bfloat16)
    b1_2d = b1.reshape(1, H_HID).astype(jnp.float32)
    b2_2d = b2.reshape(1, V).astype(jnp.float32)

    flops = 2 * N * (H_IN * H_HID + H_HID * V)
    bytes_accessed = (N * H_IN * 4 + N * V * 4
                      + H_IN * H_HID * 2 + H_HID * V * 2 + (H_HID + V) * 4)

    out = pl.pallas_call(
        _view_disc_kernel,
        out_shape=jax.ShapeDtypeStruct((N, V), jnp.float32),
        grid_spec=pltpu.PrefetchScalarGridSpec(
            num_scalar_prefetch=0,
            grid=grid,
            in_specs=[
                pl.BlockSpec((TM, H_IN), lambda i: (i, 0)),      # x tile (pipelined)
                pl.BlockSpec((H_IN, H_HID), lambda i: (0, 0)),   # w1 (VMEM-resident)
                pl.BlockSpec((1, H_HID), lambda i: (0, 0)),      # b1
                pl.BlockSpec((H_HID, V), lambda i: (0, 0)),      # w2
                pl.BlockSpec((1, V), lambda i: (0, 0)),          # b2
            ],
            out_specs=pl.BlockSpec((TM, V), lambda i: (i, 0)),   # compact V cols
        ),
        compiler_params=pltpu.CompilerParams(
            dimension_semantics=("parallel",),        # shard rows across TCs (v7x)
            vmem_limit_bytes=48 * 1024 * 1024,        # headroom under v7x's 64 MiB
        ),
        cost_estimate=pl.CostEstimate(
            flops=flops,
            transcendentals=N * V,
            bytes_accessed=bytes_accessed,
        ),
    )(x2d, w1_b, b1_2d, w2_b, b2_2d)

    return out.reshape(B, S, V)


def _init_params(key, h_in, h_hid, n_views):
    """Deterministic synthetic parameter init (PyTorch-Linear-like uniform)."""
    k1, k2, k3, k4 = jax.random.split(key, 4)
    lim1 = 1.0 / jnp.sqrt(h_in)
    lim2 = 1.0 / jnp.sqrt(h_hid)
    w1 = jax.random.uniform(k1, (h_in, h_hid), jnp.float32, -lim1, lim1)
    b1 = jax.random.uniform(k2, (h_hid,), jnp.float32, -lim1, lim1)
    w2 = jax.random.uniform(k3, (h_hid, n_views), jnp.float32, -lim2, lim2)
    b2 = jax.random.uniform(k4, (n_views,), jnp.float32, -lim2, lim2)
    return w1, b1, w2, b2


def _reference(tx, w1, b1, w2, b2):
    """Plain-JAX f32 reference of the same forward pass."""
    B, S, H_IN = tx.shape
    h = jnp.maximum(tx.reshape(-1, H_IN) @ w1 + b1, 0.0)
    logits = h @ w2 + b2
    return jax.nn.softmax(logits, axis=-1).reshape(B, S, w2.shape[1])


if __name__ == "__main__":
    H_IN, H_HID, N_VIEWS = 32, 64, 4
    key = jax.random.PRNGKey(0)
    kx, kp, kx2 = jax.random.split(key, 3)
    w1, b1, w2, b2 = _init_params(kp, H_IN, H_HID, N_VIEWS)

    # --- small demo shape (single-tile path) ---
    B, S = 2, 8
    tx = jax.random.normal(kx, (B, S, H_IN), jnp.float32)
    out = jax.block_until_ready(view_discriminator(tx, w1, b1, w2, b2))

    assert out.shape == (B, S, N_VIEWS)
    # Exact divide -> softmax rows sum to 1 to f32 precision.
    assert jnp.allclose(jnp.sum(out, axis=-1), 1.0, atol=1e-5)
    # bf16 MXU matmuls vs f32 reference: loose but meaningful tolerance.
    ref = _reference(tx, w1, b1, w2, b2)
    assert jnp.allclose(out, ref, atol=2e-2)

    # --- multi-tile path (grid=2, partial last block, no N padding) ---
    B2, S2 = 4, 300  # N = 1200 -> TM = 768, grid = 2
    tx2 = jax.random.normal(kx2, (B2, S2, H_IN), jnp.float32)
    out2 = jax.block_until_ready(view_discriminator(tx2, w1, b1, w2, b2))
    assert out2.shape == (B2, S2, N_VIEWS)
    assert jnp.allclose(jnp.sum(out2, axis=-1), 1.0, atol=1e-5)
    ref2 = _reference(tx2, w1, b1, w2, b2)
    assert jnp.allclose(out2, ref2, atol=2e-2)

    print("KERNEL_OK")
</pallas_src>

<mosaic_0001>
module attributes {stable_mosaic.version = 11 : i64} {
  func.func @_view_disc_kernel(%arg0: i32, %arg1: memref<16x32xf32, #tpu.memory_space<vmem>>, %arg2: memref<32x64xbf16, #tpu.memory_space<vmem>>, %arg3: memref<1x64xf32, #tpu.memory_space<vmem>>, %arg4: memref<64x4xbf16, #tpu.memory_space<vmem>>, %arg5: memref<1x4xf32, #tpu.memory_space<vmem>>, %arg6: memref<16x4xf32, #tpu.memory_space<vmem>>) attributes {dimension_semantics = [#tpu.dimension_semantics<parallel>], iteration_bounds = array<i64: 1>, scalar_prefetch = 0 : i64, scratch_operands = 0 : i64, tpu.core_type = #tpu.core_type<tc>, window_params = [{transform_indices = @transform_0, window_bounds = array<i64: 16, 32>}, {pipeline_mode = #tpu.pipeline_mode<synchronous>, transform_indices = @transform_1, window_bounds = array<i64: 32, 64>}, {pipeline_mode = #tpu.pipeline_mode<synchronous>, transform_indices = @transform_2, window_bounds = array<i64: 1, 64>}, {pipeline_mode = #tpu.pipeline_mode<synchronous>, transform_indices = @transform_3, window_bounds = array<i64: 64, 4>}, {pipeline_mode = #tpu.pipeline_mode<synchronous>, transform_indices = @transform_4, window_bounds = array<i64: 1, 4>}, {transform_indices = @transform_5, window_bounds = array<i64: 16, 4>}]} {
    %c0 = arith.constant 0 : index
    %c0_0 = arith.constant 0 : index
    %0 = vector.load %arg1[%c0, %c0_0] : memref<16x32xf32, #tpu.memory_space<vmem>>, vector<16x32xf32>
    %1 = arith.truncf %0 : vector<16x32xf32> to vector<16x32xbf16>
    %c0_1 = arith.constant 0 : index
    %c0_2 = arith.constant 0 : index
    %2 = vector.load %arg2[%c0_1, %c0_2] : memref<32x64xbf16, #tpu.memory_space<vmem>>, vector<32x64xbf16>
    %cst = arith.constant dense<0.000000e+00> : vector<16x64xf32>
    %3 = tpu.matmul %1, %2, %cst {dimension_numbers = #tpu.dot_dimension_numbers<[1], [0], [0], [1], [0, 0, 1, 1], [], []>} : vector<16x32xbf16>, vector<32x64xbf16>, vector<16x64xf32> -> vector<16x64xf32>
    %c0_3 = arith.constant 0 : index
    %c0_4 = arith.constant 0 : index
    %4 = vector.load %arg3[%c0_3, %c0_4] : memref<1x64xf32, #tpu.memory_space<vmem>>, vector<1x64xf32>
    %5 = vector.broadcast %4 : vector<1x64xf32> to vector<16x64xf32>
    %6 = arith.addf %3, %5 : vector<16x64xf32>
    %cst_5 = arith.constant 0.000000e+00 : f32
    %7 = vector.broadcast %cst_5 : f32 to vector<16x64xf32>
    %8 = arith.maximumf %6, %7 : vector<16x64xf32>
    %9 = arith.truncf %8 : vector<16x64xf32> to vector<16x64xbf16>
    %c0_6 = arith.constant 0 : index
    %c0_7 = arith.constant 0 : index
    %10 = vector.load %arg4[%c0_6, %c0_7] : memref<64x4xbf16, #tpu.memory_space<vmem>>, vector<64x4xbf16>
    %cst_8 = arith.constant dense<0.000000e+00> : vector<16x4xf32>
    %11 = tpu.matmul %9, %10, %cst_8 {dimension_numbers = #tpu.dot_dimension_numbers<[1], [0], [0], [1], [0, 0, 1, 1], [], []>} : vector<16x64xbf16>, vector<64x4xbf16>, vector<16x4xf32> -> vector<16x4xf32>
    %c0_9 = arith.constant 0 : index
    %c0_10 = arith.constant 0 : index
    %12 = vector.load %arg5[%c0_9, %c0_10] : memref<1x4xf32, #tpu.memory_space<vmem>>, vector<1x4xf32>
    %13 = vector.broadcast %12 : vector<1x4xf32> to vector<16x4xf32>
    %14 = arith.addf %11, %13 : vector<16x4xf32>
    %cst_11 = arith.constant dense<0xFF800000> : vector<16xf32>
    %15 = vector.multi_reduction <maximumf>, %14, %cst_11 [1] : vector<16x4xf32> to vector<16xf32>
    %16 = vector.shape_cast %15 : vector<16xf32> to vector<16x1xf32>
    %17 = vector.broadcast %16 : vector<16x1xf32> to vector<16x4xf32>
    %18 = arith.subf %14, %17 : vector<16x4xf32>
    %19 = math.exp %18 : vector<16x4xf32>
    %cst_12 = arith.constant dense<0.000000e+00> : vector<16xf32>
    %20 = vector.multi_reduction <add>, %19, %cst_12 [1] : vector<16x4xf32> to vector<16xf32>
    %21 = vector.shape_cast %20 : vector<16xf32> to vector<16x1xf32>
    %22 = vector.broadcast %21 : vector<16x1xf32> to vector<16x4xf32>
    %23 = arith.divf %19, %22 : vector<16x4xf32>
    %c0_13 = arith.constant 0 : index
    %c0_14 = arith.constant 0 : index
    %24 = vector.load %arg6[%c0_13, %c0_14] : memref<16x4xf32, #tpu.memory_space<vmem>>, vector<16x4xf32>
    tpu.vector_store %arg6[%c0_13, %c0_14], %23 {strides = array<i32>} : memref<16x4xf32, #tpu.memory_space<vmem>>, vector<16x4xf32>,
    return
  }
  func.func @transform_0(%arg0: i32) -> (i32, i32) {
    %c0_i32 = arith.constant 0 : i32
    %c0_i32_0 = arith.constant 0 : i32
    return %arg0, %c0_i32 : i32, i32
  }
  func.func @transform_1(%arg0: i32) -> (i32, i32) {
    %c0_i32 = arith.constant 0 : i32
    %c0_i32_0 = arith.constant 0 : i32
    %c0_i32_1 = arith.constant 0 : i32
    return %c0_i32, %c0_i32_0 : i32, i32
  }
  func.func @transform_2(%arg0: i32) -> (i32, i32) {
    %c0_i32 = arith.constant 0 : i32
    %c0_i32_0 = arith.constant 0 : i32
    %c0_i32_1 = arith.constant 0 : i32
    return %c0_i32, %c0_i32_0 : i32, i32
  }
  func.func @transform_3(%arg0: i32) -> (i32, i32) {
    %c0_i32 = arith.constant 0 : i32
    %c0_i32_0 = arith.constant 0 : i32
    %c0_i32_1 = arith.constant 0 : i32
    return %c0_i32, %c0_i32_0 : i32, i32
  }
  func.func @transform_4(%arg0: i32) -> (i32, i32) {
    %c0_i32 = arith.constant 0 : i32
    %c0_i32_0 = arith.constant 0 : i32
    %c0_i32_1 = arith.constant 0 : i32
    return %c0_i32, %c0_i32_0 : i32, i32
  }
  func.func @transform_5(%arg0: i32) -> (i32, i32) {
    %c0_i32 = arith.constant 0 : i32
    %c0_i32_0 = arith.constant 0 : i32
    return %arg0, %c0_i32 : i32, i32
  }
}

</mosaic_0001>

<llo_original>
// kernel: view_discriminator.1
$region0: #{view_discriminator.1}
  #allocation0 [shape = 'u32[]', space=smem, size = 0x4, offset = 0x4, fixed_abs, tag = 'smem constant byte address 0x4 - core index']
  #allocation1 [shape = 'u32[144,128]{1,0:T(1,128)}', space=vmem, size = 0x12000, scoped, tag = 'internal scratch']
  %s0 = inlined_call_operand.vmem [shape: f32[16,32], index: 0, kind: input, shape index: {}]
  %s1 = inlined_call_operand.vmem [shape: bf16[32,64], index: 1, kind: input, shape index: {}]
  %s2 = inlined_call_operand.vmem [shape: f32[1,64], index: 2, kind: input, shape index: {}]
  %s3 = inlined_call_operand.vmem [shape: bf16[64,4], index: 3, kind: input, shape index: {}]
  %s4 = inlined_call_operand.vmem [shape: f32[1,4], index: 4, kind: input, shape index: {}]
  %s5 = inlined_call_operand.vmem [shape: f32[16,4], index: 5, kind: output, shape index: {}]
  %s6 = sld [smem:[#allocation0]]
  $region30: #{view_discriminator.1} parent=0
    _
  %s8 = ssub.s32 1, %s6
  %s9 = scalar_select 0, %s8, %s6
  // Predicated region
  $region2: #{view_discriminator.1} parent=0 // pred_check
    _
  $region3: #{view_discriminator.1} parent=0 // pred_check_branch
    %11 = sbr.rel (0) target = $region5
  $region4: #{view_discriminator.1} parent=0 // pred_region
    _
  $region5: #{view_discriminator.1} parent=0 // pred_fallthru
    _
  // Predicated region
  $region6: #{view_discriminator.1} parent=0 // pred_check
    _
  $region7: #{view_discriminator.1} parent=0 // pred_check_branch
    %13 = sbr.rel (0) target = $region9
  $region8: #{view_discriminator.1} parent=0 // pred_region
    _
  $region9: #{view_discriminator.1} parent=0 // pred_fallthru
    _
  // Predicated region
  $region10: #{view_discriminator.1} parent=0 // pred_check
    _
  $region11: #{view_discriminator.1} parent=0 // pred_check_branch
    %15 = sbr.rel (0) target = $region13
  $region12: #{view_discriminator.1} parent=0 // pred_region
    _
  $region13: #{view_discriminator.1} parent=0 // pred_fallthru
    _
  // Predicated region
  $region14: #{view_discriminator.1} parent=0 // pred_check
    _
  $region15: #{view_discriminator.1} parent=0 // pred_check_branch
    %17 = sbr.rel (0) target = $region17
  $region16: #{view_discriminator.1} parent=0 // pred_region
    _
  $region17: #{view_discriminator.1} parent=0 // pred_fallthru
    _
  // Predicated region
  $region18: #{view_discriminator.1} parent=0 // pred_check
    _
  $region19: #{view_discriminator.1} parent=0 // pred_check_branch
    %19 = sbr.rel (0) target = $region21
  $region20: #{view_discriminator.1} parent=0 // pred_region
    _
  $region21: #{view_discriminator.1} parent=0 // pred_fallthru
    _
  %v21 = vld [vmem:[%s0] sm:$0xff]
  %v22 = vld [vmem:[%s0 + $0x8] sm:$0xff]
  %v23 = vpack.c.bf16 %v22, %v21
  %v24 = vld [vmem:[%s1] sm:$0xf]
  %v25 = vld [vmem:[%s1 + $0x4] sm:$0xf]
  %v26 = vld [vmem:[%s1 + $0x8] sm:$0xf]
  %v27 = vld [vmem:[%s1 + $0xc] sm:$0xf]
  %v28 = vld [vmem:[%s2] sm:$0x1]
  %v30 = vlaneseq
  %v31 = vshrl.u32 %v30, 7
  %v32 = vsub.s32 0, %v31
  %v33 = vrot.slane %v28, %v32
  %v39 = vunpack.c.l.b16 %v24
  %v40 = vunpack.c.l.b16 %v25
  %v41 = vunpack.c.l.b16 %v26
  %v42 = vunpack.c.l.b16 %v27
  %v43 = vpack.c.b16 %v40, %v39
  %v44 = vpack.c.b16 %v42, %v41
  %vm47 = vcmask 261120
  %v49 = vsel %vm47, %v23, 0
  %51 = vmatprep.subr.bf16.mxu0 0
  %52 = vmatpush1.bf16.msra.mxu0 %v43
  %53 = vmatprep.subr.bf16.mxu0 0
  %54 = vmatpush1.bf16.msra.mxu0 %v44
  %55 = vmatprep.subr.bf16.mxu0 0
  %56 = vmatpush1.bf16.msra.mxu0 0
  %57 = vmatprep.subr.bf16.mxu0 0
  %58 = vmatpush1.bf16.msra.mxu0 0
  %59 = vmatprep.subr.bf16.mxu0 0
  %60 = vmatpush1.bf16.msra.mxu0 0
  %61 = vmatprep.subr.bf16.mxu0 0
  %62 = vmatpush1.bf16.msra.mxu0 0
  %63 = vmatprep.subr.bf16.mxu0 0
  %64 = vmatpush1.bf16.msra.mxu0 0
  %65 = vmatprep.subr.bf16.mxu0 0
  %66 = vmatpush1.bf16.msra.mxu0 0
  %67 = vmatprep.subr.bf16.mxu0 0
  %68 = vmatpush1.bf16.msra.mxu0 0
  %69 = vmatprep.subr.bf16.mxu0 0
  %70 = vmatpush1.bf16.msra.mxu0 0
  %71 = vmatprep.subr.bf16.mxu0 0
  %72 = vmatpush1.bf16.msra.mxu0 0
  %73 = vmatprep.subr.bf16.mxu0 0
  %74 = vmatpush1.bf16.msra.mxu0 0
  %75 = vmatprep.subr.bf16.mxu0 0
  %76 = vmatpush1.bf16.msra.mxu0 0
  %77 = vmatprep.subr.bf16.mxu0 0
  %78 = vmatpush1.bf16.msra.mxu0 0
  %79 = vmatprep.subr.bf16.mxu0 0
  %80 = vmatpush1.bf16.msra.mxu0 0
  %81 = vmatprep.subr.bf16.mxu0 0
  %82 = vmatpush1.bf16.msra.mxu0 0
  %83 = vmatprep.mubr.bf16.mxu0 0
  %84 = vmatmul.mubr.bf16.gmra.mrb[0].mxu0 %v49
  %v85 = vpop.f32.mrb[0].mxu0
  %v86 = vadd.f32 %v33, %v85
  %v87 = vpop.f32.mrb[0].mxu0
  %v88 = vpop.f32.mrb[0].mxu0
  %v89 = vadd.f32 %v33, %v88
  %v90 = vpop.f32.mrb[0].mxu0
  %91 = vdwg.mxu0
  %v92 = vmax.f32 %v86, 0.0
  %v93 = vmax.f32 %v89, 0.0
  %v94 = vpack.c.bf16 %v93, %v92
  %v95 = vld [vmem:[%s3] sm:$0xf]
  %v96 = vld [vmem:[%s3 + $0x4] sm:$0xf]
  %v97 = vld [vmem:[%s3 + $0x8] sm:$0xf]
  %v98 = vld [vmem:[%s3 + $0xc] sm:$0xf]
  %v99 = vld [vmem:[%s3 + $0x10] sm:$0xf]
  %v100 = vld [vmem:[%s3 + $0x14] sm:$0xf]
  %v101 = vld [vmem:[%s3 + $0x18] sm:$0xf]
  %v102 = vld [vmem:[%s3 + $0x1c] sm:$0xf]
  %v103 = vld [vmem:[%s4] sm:$0x1]
  %v105 = vlaneseq
  %v106 = vshrl.u32 %v105, 7
  %v107 = vsub.s32 0, %v106
  %v108 = vrot.slane %v103, %v107
  %v118 = vunpack.c.l.b16 %v95
  %v119 = vunpack.c.l.b16 %v96
  %v120 = vunpack.c.l.b16 %v97
  %v121 = vunpack.c.l.b16 %v98
  %v122 = vunpack.c.l.b16 %v99
  %v123 = vunpack.c.l.b16 %v100
  %v124 = vunpack.c.l.b16 %v101
  %v125 = vunpack.c.l.b16 %v102
  %v126 = vpack.c.b16 %v119, %v118
  %v127 = vpack.c.b16 %v121, %v120
  %v128 = vpack.c.b16 %v123, %v122
  %v129 = vpack.c.b16 %v125, %v124
  %vm134 = vcmask 523264
  %v136 = vsel %vm134, %v94, 0
  %138 = vmatprep.subr.bf16.mxu0 0
  %139 = vmatpush1.bf16.msra.mxu0 %v126
  %140 = vmatprep.subr.bf16.mxu0 0
  %141 = vmatpush1.bf16.msra.mxu0 %v127
  %142 = vmatprep.subr.bf16.mxu0 0
  %143 = vmatpush1.bf16.msra.mxu0 %v128
  %144 = vmatprep.subr.bf16.mxu0 0
  %145 = vmatpush1.bf16.msra.mxu0 %v129
  %146 = vmatprep.subr.bf16.mxu0 0
  %147 = vmatpush1.bf16.msra.mxu0 0
  %148 = vmatprep.subr.bf16.mxu0 0
  %149 = vmatpush1.bf16.msra.mxu0 0
  %150 = vmatprep.subr.bf16.mxu0 0
  %151 = vmatpush1.bf16.msra.mxu0 0
  %152 = vmatprep.subr.bf16.mxu0 0
  %153 = vmatpush1.bf16.msra.mxu0 0
  %154 = vmatprep.subr.bf16.mxu0 0
  %155 = vmatpush1.bf16.msra.mxu0 0
  %156 = vmatprep.subr.bf16.mxu0 0
  %157 = vmatpush1.bf16.msra.mxu0 0
  %158 = vmatprep.subr.bf16.mxu0 0
  %159 = vmatpush1.bf16.msra.mxu0 0
  %160 = vmatprep.subr.bf16.mxu0 0
  %161 = vmatpush1.bf16.msra.mxu0 0
  %162 = vmatprep.subr.bf16.mxu0 0
  %163 = vmatpush1.bf16.msra.mxu0 0
  %164 = vmatprep.subr.bf16.mxu0 0
  %165 = vmatpush1.bf16.msra.mxu0 0
  %166 = vmatprep.subr.bf16.mxu0 0
  %167 = vmatpush1.bf16.msra.mxu0 0
  %168 = vmatprep.subr.bf16.mxu0 0
  %169 = vmatpush1.bf16.msra.mxu0 0
  %170 = vmatprep.mubr.bf16.mxu0 0
  %171 = vmatmul.mubr.bf16.gmra.mrb[0].mxu0 %v136
  %v172 = vpop.f32.mrb[0].mxu0
  %v173 = vadd.f32 %v108, %v172
  %v174 = vpop.f32.mrb[0].mxu0
  %v175 = vpop.f32.mrb[0].mxu0
  %v176 = vadd.f32 %v108, %v175
  %v177 = vpop.f32.mrb[0].mxu0
  %178 = vdwg.mxu0
  %vm179 = vcmask 31744
  %v180 = vsel %vm179, %v173, -inf
  %181 = vmax.xlane.f32.xlu0 %v180
  %v182 = vpop.xlane.xlu0 %181
  %v183 = vsel %vm179, %v176, -inf
  %184 = vmax.xlane.f32.xlu0 %v183
  %v185 = vpop.xlane.xlu0 %184
  %v186 = vsub.f32 %v173, %v182
  %v187 = vsub.f32 %v176, %v185
  %v188 = vmul.f32 %v186, 1.442695
  %v189 = vpow.pop %v188
  %v190 = vmul.f32 %v187, 1.442695
  %v191 = vpow.pop %v190
  %v192 = vsel %vm179, %v189, 0.0
  %193 = vadd.xlane.f32.xlu0 %v192
  %v194 = vpop.xlane.xlu0 %193
  %v195 = vsel %vm179, %v191, 0.0
  %196 = vadd.xlane.f32.xlu0 %v195
  %v197 = vpop.xlane.xlu0 %196
  %v198 = vrcp.pop %v194
  %v199 = vmul.f32 %v189, %v198
  %v200 = vrcp.pop %v197
  %v201 = vmul.f32 %v191, %v200
  %202 = vst.msk [vmem:[%s5] sm:$0xff] %vm179, %v199
  %203 = vst.msk [vmem:[%s5 + $0x8] sm:$0xff] %vm179, %v201
  // Predicated region
  $region22: #{view_discriminator.1} parent=0 // pred_check
    _
  $region23: #{view_discriminator.1} parent=0 // pred_check_branch
    %205 = sbr.rel (0) target = $region25
  $region24: #{view_discriminator.1} parent=0 // pred_region
    _
  $region25: #{view_discriminator.1} parent=0 // pred_fallthru
    _
  // Predicated region
  $region26: #{view_discriminator.1} parent=0 // pred_check
    _
  $region27: #{view_discriminator.1} parent=0 // pred_check_branch
    %207 = sbr.rel (0) target = $region29
  $region28: #{view_discriminator.1} parent=0 // pred_region
    _
  $region29: #{view_discriminator.1} parent=0 // pred_fallthru
    _

</llo_original>
